<compile_context>
chip_gen: v7x
topology: tpu7x:2x2x1
jax: 0.10.0
libtpu: 0.0.40
codegen_flags: <defaults>
</compile_context>

<pallas_src>
import functools

import jax
import jax.numpy as jnp
from jax.experimental import pallas as pl
from jax.experimental.pallas import tpu as pltpu


_CLAMP_MAX = 50.0
_VMEM_LIMIT = 40 * 1024 * 1024          # scoped VMEM budget, safe on v5e/v6e/v7x
_VMEM_TILE_BUDGET = 24 * 1024 * 1024    # per-step double-buffered footprint target
_COLLAPSE_K_MAX_G = 2048                # collapse contraction if W^T slab is small


def _softplus(x):
    # Numerically stable softplus: log1p(exp(-|x|)) + max(x, 0).
    return jnp.log1p(jnp.exp(-jnp.abs(x))) + jnp.maximum(x, 0.0)


def _round_up(x, m):
    return ((x + m - 1) // m) * m


def _gene_tiling(num_g, collapse_max=_COLLAPSE_K_MAX_G):
    """Return (g_pad, tn, tk); tk is None when the contraction is collapsed."""
    g_pad = _round_up(num_g, 128)
    if g_pad <= collapse_max:
        tn = 256 if g_pad % 256 == 0 else 128
        return g_pad, tn, None
    # Large-GRN fallback: tile the contraction.
    g_pad = _round_up(num_g, 512)
    return g_pad, 256, 512


def _pick_tm(n_cells, g_pad, tn, tk):
    """Pick the cell tile by trading W^T re-reads against padded-row waste,
    under a double-buffered VMEM budget."""

    def step_bytes(tm):
        if tk is None:   # collapsed path: full-width f32 s strip resident
            ins = tm * g_pad * 4 + tm * tn * 4 + g_pad * tn * 2
        else:            # tiled path: s twice (matmul slice + epilogue slice)
            ins = tm * tk * 4 + tk * tn * 2 + 2 * tm * tn * 4
        outs = 2 * tm * tn * 4
        return 2 * (ins + outs) + 3 * 2 * tn * 4

    best_tm, best_cost = 8, None
    for cand in (8, 16, 32, 64, 128, 256, 512, 1024):
        if cand > 8 and step_bytes(cand) > _VMEM_TILE_BUDGET:
            break
        m_pad = _round_up(n_cells, cand)
        n_row_tiles = m_pad // cand
        # HBM bytes: W^T bf16 re-read once per cell tile + f32 activations/outputs.
        cost = n_row_tiles * 2 * g_pad * g_pad + 16 * m_pad * g_pad
        if best_cost is None or cost < best_cost:
            best_tm, best_cost = cand, cost
    return best_tm, _round_up(n_cells, best_tm)


# ----------------------------------------------------------------------------
# Kernels
# ----------------------------------------------------------------------------
def _v_encoder_kernel_fused(s_full_ref, u_ref, wt_ref, b_ref, beta_ref,
                            gamma_ref, du_ref, ds_ref, *, tn):
    """Collapsed-contraction path: one MXU call per (cell tile, gene tile)."""
    j = pl.program_id(1)
    # (tm, G) @ (G, tn): cast LHS to bf16 in-kernel, accumulate in f32.
    pre = jnp.dot(s_full_ref[...].astype(jnp.bfloat16), wt_ref[...],
                  preferred_element_type=jnp.float32) + b_ref[...]
    alpha = jnp.minimum(_softplus(pre), _CLAMP_MAX)      # softplus >= 0 already
    col = pl.multiple_of(j * tn, tn)
    s_blk = s_full_ref[:, pl.ds(col, tn)]                # epilogue gene window
    bu = beta_ref[...] * u_ref[...]
    du_ref[...] = (alpha - bu).astype(du_ref.dtype)
    ds_ref[...] = (bu - gamma_ref[...] * s_blk).astype(ds_ref.dtype)


def _v_encoder_kernel_tiled(s_mm_ref, wt_ref, b_ref, u_ref, s_ep_ref,
                            beta_ref, gamma_ref, du_ref, ds_ref):
    """Tiled-contraction fallback: accumulate directly into the resident du block."""
    k = pl.program_id(2)

    @pl.when(k == 0)
    def _():
        du_ref[...] = jnp.zeros_like(du_ref)

    du_ref[...] += jnp.dot(s_mm_ref[...].astype(jnp.bfloat16), wt_ref[...],
                           preferred_element_type=jnp.float32)

    @pl.when(k == pl.num_programs(2) - 1)
    def _():
        alpha = jnp.minimum(_softplus(du_ref[...] + b_ref[...]), _CLAMP_MAX)
        bu = beta_ref[...] * u_ref[...]
        du_ref[...] = (alpha - bu).astype(du_ref.dtype)
        ds_ref[...] = (bu - gamma_ref[...] * s_ep_ref[...]).astype(ds_ref.dtype)


# ----------------------------------------------------------------------------
# Wrappers
# ----------------------------------------------------------------------------
def prepare_velocity_params(W, b, beta_unconstr, gamma_unconstr,
                            collapse_max=_COLLAPSE_K_MAX_G):
    """One-time (per model, NOT per ODE step) weight preprocessing."""
    num_g = W.shape[0]
    g_pad, _, _ = _gene_tiling(num_g, collapse_max)
    f32 = jnp.float32
    pg = g_pad - num_g
    w_t = jnp.pad(W.astype(f32).T, ((0, pg), (0, pg))).astype(jnp.bfloat16)
    b_row = jnp.pad(b.astype(f32), (0, pg)).reshape(1, g_pad)
    beta_row = jnp.pad(jnp.minimum(_softplus(beta_unconstr.astype(f32)), _CLAMP_MAX),
                       (0, pg)).reshape(1, g_pad)
    gamma_row = jnp.pad(jnp.minimum(_softplus(gamma_unconstr.astype(f32)), _CLAMP_MAX),
                        (0, pg)).reshape(1, g_pad)
    return {"w_t": w_t, "b_row": b_row, "beta_row": beta_row, "gamma_row": gamma_row}


def velocity_encoder_pallas(u, s, params, collapse_max=_COLLAPSE_K_MAX_G):
    """du, ds of shape (n_cells, num_g) from the GRN velocity encoder."""
    n_cells, num_g = u.shape
    g_pad, tn, tk = _gene_tiling(num_g, collapse_max)
    tm, m_pad = _pick_tm(n_cells, g_pad, tn, tk)
    f32 = jnp.float32

    u_p = jnp.pad(u.astype(f32), ((0, m_pad - n_cells), (0, g_pad - num_g)))
    s_p = jnp.pad(s.astype(f32), ((0, m_pad - n_cells), (0, g_pad - num_g)))

    w_t = params["w_t"]
    b_row = params["b_row"]
    beta_row = params["beta_row"]
    gamma_row = params["gamma_row"]

    out_shape = (jax.ShapeDtypeStruct((m_pad, g_pad), f32),
                 jax.ShapeDtypeStruct((m_pad, g_pad), f32))
    out_specs = [pl.BlockSpec((tm, tn), lambda i, j, *_: (i, j)),
                 pl.BlockSpec((tm, tn), lambda i, j, *_: (i, j))]

    if tk is None:
        # ---------- Path A: contraction collapsed (typical RegVelo sizes) ----------
        grid = (m_pad // tm, g_pad // tn)
        du_p, ds_p = pl.pallas_call(
            functools.partial(_v_encoder_kernel_fused, tn=tn),
            out_shape=out_shape,
            grid_spec=pltpu.PrefetchScalarGridSpec(
                num_scalar_prefetch=0,
                grid=grid,
                in_specs=[
                    # Full-width f32 s strip: block index constant across j -> no re-DMA.
                    pl.BlockSpec((tm, g_pad), lambda i, j: (i, 0)),
                    pl.BlockSpec((tm, tn), lambda i, j: (i, j)),     # u (epilogue)
                    pl.BlockSpec((g_pad, tn), lambda i, j: (0, j)),  # W^T (bf16)
                    pl.BlockSpec((1, tn), lambda i, j: (0, j)),      # bias
                    pl.BlockSpec((1, tn), lambda i, j: (0, j)),      # beta (activated)
                    pl.BlockSpec((1, tn), lambda i, j: (0, j)),      # gamma (activated)
                ],
                out_specs=out_specs,
            ),
            compiler_params=pltpu.CompilerParams(
                dimension_semantics=("parallel", "parallel"),
                vmem_limit_bytes=_VMEM_LIMIT,
            ),
        )(s_p, u_p, w_t, b_row, beta_row, gamma_row)
    else:
        # ---------- Path B: large GRN, tiled contraction (k last) ----------
        grid = (m_pad // tm, g_pad // tn, g_pad // tk)
        du_p, ds_p = pl.pallas_call(
            _v_encoder_kernel_tiled,
            out_shape=out_shape,
            grid_spec=pltpu.PrefetchScalarGridSpec(
                num_scalar_prefetch=0,
                grid=grid,
                in_specs=[
                    pl.BlockSpec((tm, tk), lambda i, j, k: (i, k)),  # s (matmul LHS)
                    pl.BlockSpec((tk, tn), lambda i, j, k: (k, j)),  # W^T (bf16)
                    pl.BlockSpec((1, tn), lambda i, j, k: (0, j)),   # bias
                    pl.BlockSpec((tm, tn), lambda i, j, k: (i, j)),  # u (epilogue)
                    pl.BlockSpec((tm, tn), lambda i, j, k: (i, j)),  # s (epilogue)
                    pl.BlockSpec((1, tn), lambda i, j, k: (0, j)),   # beta
                    pl.BlockSpec((1, tn), lambda i, j, k: (0, j)),   # gamma
                ],
                out_specs=out_specs,
            ),
            compiler_params=pltpu.CompilerParams(
                dimension_semantics=("parallel", "parallel", "arbitrary"),
                vmem_limit_bytes=_VMEM_LIMIT,
            ),
        )(s_p, w_t, b_row, u_p, s_p, beta_row, gamma_row)

    return du_p[:n_cells, :num_g], ds_p[:n_cells, :num_g]


@functools.partial(jax.jit, static_argnames=("num_g", "collapse_max"))
def v_encoder_batch_forward(t, y, params, *, num_g,
                            collapse_max=_COLLAPSE_K_MAX_G):
    """Pallas equivalent of v_encoder_batch.forward: y (batch, 2) -> v (batch, 2)."""
    del t  # unused; kept for ODE-solver signature compatibility
    u = y[:, 0].reshape(-1, num_g)
    s = y[:, 1].reshape(-1, num_g)
    du, ds = velocity_encoder_pallas(u, s, params, collapse_max)
    # Interleave back to (batch_size, 2) in JAX (never inside the kernel).
    return jnp.concatenate([du.reshape(-1, 1), ds.reshape(-1, 1)], axis=1)


def v_encoder_batch_reference(t, y, W, b, beta_unconstr, gamma_unconstr, *, num_g):
    """Pure-JAX reference mirroring the PyTorch module (f32 throughout)."""
    del t
    u = y[:, 0].reshape(-1, num_g)
    s = y[:, 1].reshape(-1, num_g)
    alpha = jnp.clip(_softplus(s @ W.T + b), 0.0, _CLAMP_MAX)
    beta = jnp.clip(_softplus(beta_unconstr), 0.0, _CLAMP_MAX)
    gamma = jnp.clip(_softplus(gamma_unconstr), 0.0, _CLAMP_MAX)
    du = alpha - beta * u
    ds = beta * u - gamma * s
    return jnp.concatenate([du.reshape(-1, 1), ds.reshape(-1, 1)], axis=1)


def _make_inputs(key, n_cells, num_g, w_scale):
    k_y, k_w, k_b, k_bt, k_gm = jax.random.split(key, 5)
    batch = n_cells * num_g
    y = jax.random.uniform(k_y, (batch, 2), dtype=jnp.float32, minval=0.0, maxval=2.0)
    W = jax.random.normal(k_w, (num_g, num_g), dtype=jnp.float32) * w_scale
    b = jax.random.normal(k_b, (num_g,), dtype=jnp.float32) * 0.1
    bt = jax.random.normal(k_bt, (num_g,), dtype=jnp.float32)
    gm = jax.random.normal(k_gm, (num_g,), dtype=jnp.float32)
    return y, W, b, bt, gm


if __name__ == "__main__":
    key = jax.random.PRNGKey(0)
    k1, k2 = jax.random.split(key)
    t = jnp.zeros(())  # unused by the encoder

    # ---- Test 1: typical small problem, collapsed-contraction path ----
    num_g, n_cells = 8, 6
    y, W, b, bt, gm = _make_inputs(k1, n_cells, num_g, w_scale=0.5)
    params = prepare_velocity_params(W, b, bt, gm)       # hoisted, once per model
    v = v_encoder_batch_forward(t, y, params, num_g=num_g)
    v = jax.block_until_ready(v)
    v_ref = v_encoder_batch_reference(t, y, W, b, bt, gm, num_g=num_g)
    assert v.shape == (n_cells * num_g, 2), v.shape
    if not jnp.allclose(v, v_ref, atol=5e-2, rtol=5e-2):
        max_err = float(jnp.max(jnp.abs(v - v_ref)))
        raise AssertionError(f"Pallas (fused path) mismatch, max abs err = {max_err}")

    # ---- Test 2: force the tiled-contraction fallback (multi-k accumulation) ----
    num_g2, n_cells2 = 640, 5
    y2, W2, b2, bt2, gm2 = _make_inputs(k2, n_cells2, num_g2,
                                        w_scale=0.5 / float(num_g2) ** 0.5)
    params2 = prepare_velocity_params(W2, b2, bt2, gm2, collapse_max=0)
    v2 = v_encoder_batch_forward(t, y2, params2, num_g=num_g2, collapse_max=0)
    v2 = jax.block_until_ready(v2)
    v2_ref = v_encoder_batch_reference(t, y2, W2, b2, bt2, gm2, num_g=num_g2)
    assert v2.shape == (n_cells2 * num_g2, 2), v2.shape
    if not jnp.allclose(v2, v2_ref, atol=5e-2, rtol=5e-2):
        max_err = float(jnp.max(jnp.abs(v2 - v2_ref)))
        raise AssertionError(f"Pallas (tiled path) mismatch, max abs err = {max_err}")

    print("KERNEL_OK")
</pallas_src>

<mosaic_0001>
module attributes {stable_mosaic.version = 11 : i64} {
  func.func @_v_encoder_kernel_fused(%arg0: i32, %arg1: i32, %arg2: memref<8x128xf32, #tpu.memory_space<vmem>>, %arg3: memref<8x128xf32, #tpu.memory_space<vmem>>, %arg4: memref<128x128xbf16, #tpu.memory_space<vmem>>, %arg5: memref<1x128xf32, #tpu.memory_space<vmem>>, %arg6: memref<1x128xf32, #tpu.memory_space<vmem>>, %arg7: memref<1x128xf32, #tpu.memory_space<vmem>>, %arg8: memref<8x128xf32, #tpu.memory_space<vmem>>, %arg9: memref<8x128xf32, #tpu.memory_space<vmem>>) attributes {dimension_semantics = [#tpu.dimension_semantics<parallel>, #tpu.dimension_semantics<parallel>], iteration_bounds = array<i64: 1, 1>, scalar_prefetch = 0 : i64, scratch_operands = 0 : i64, tpu.core_type = #tpu.core_type<tc>, window_params = [{transform_indices = @transform_0, window_bounds = array<i64: 8, 128>}, {transform_indices = @transform_1, window_bounds = array<i64: 8, 128>}, {transform_indices = @transform_2, window_bounds = array<i64: 128, 128>}, {transform_indices = @transform_3, window_bounds = array<i64: 1, 128>}, {transform_indices = @transform_4, window_bounds = array<i64: 1, 128>}, {transform_indices = @transform_5, window_bounds = array<i64: 1, 128>}, {transform_indices = @transform_6, window_bounds = array<i64: 8, 128>}, {transform_indices = @transform_7, window_bounds = array<i64: 8, 128>}]} {
    %c0 = arith.constant 0 : index
    %c0_0 = arith.constant 0 : index
    %0 = vector.load %arg2[%c0, %c0_0] : memref<8x128xf32, #tpu.memory_space<vmem>>, vector<8x128xf32>
    %1 = arith.truncf %0 : vector<8x128xf32> to vector<8x128xbf16>
    %c0_1 = arith.constant 0 : index
    %c0_2 = arith.constant 0 : index
    %2 = vector.load %arg4[%c0_1, %c0_2] : memref<128x128xbf16, #tpu.memory_space<vmem>>, vector<128x128xbf16>
    %cst = arith.constant dense<0.000000e+00> : vector<8x128xf32>
    %3 = tpu.matmul %1, %2, %cst {dimension_numbers = #tpu.dot_dimension_numbers<[1], [0], [0], [1], [0, 0, 1, 1], [], []>} : vector<8x128xbf16>, vector<128x128xbf16>, vector<8x128xf32> -> vector<8x128xf32>
    %c0_3 = arith.constant 0 : index
    %c0_4 = arith.constant 0 : index
    %4 = vector.load %arg5[%c0_3, %c0_4] : memref<1x128xf32, #tpu.memory_space<vmem>>, vector<1x128xf32>
    %5 = vector.broadcast %4 : vector<1x128xf32> to vector<8x128xf32>
    %6 = arith.addf %3, %5 : vector<8x128xf32>
    %7 = math.absf %6 : vector<8x128xf32>
    %cst_5 = arith.constant 0.000000e+00 : f32
    %8 = vector.broadcast %cst_5 : f32 to vector<8x128xf32>
    %9 = arith.subf %8, %7 : vector<8x128xf32>
    %10 = math.exp %9 : vector<8x128xf32>
    %11 = math.log1p %10 : vector<8x128xf32>
    %cst_6 = arith.constant 0.000000e+00 : f32
    %12 = vector.broadcast %cst_6 : f32 to vector<8x128xf32>
    %13 = arith.maximumf %6, %12 : vector<8x128xf32>
    %14 = arith.addf %11, %13 : vector<8x128xf32>
    %cst_7 = arith.constant 5.000000e+01 : f32
    %15 = vector.broadcast %cst_7 : f32 to vector<8x128xf32>
    %16 = arith.minimumf %14, %15 : vector<8x128xf32>
    %c128_i32 = arith.constant 128 : i32
    %17 = arith.muli %arg1, %c128_i32 : i32
    %18 = tpu.assume_multiple %17, 128 : i32
    %c0_8 = arith.constant 0 : index
    %19 = arith.index_cast %18 : i32 to index
    %20 = vector.load %arg2[%c0_8, %19] : memref<8x128xf32, #tpu.memory_space<vmem>>, vector<8x128xf32>
    %c0_9 = arith.constant 0 : index
    %c0_10 = arith.constant 0 : index
    %21 = vector.load %arg6[%c0_9, %c0_10] : memref<1x128xf32, #tpu.memory_space<vmem>>, vector<1x128xf32>
    %c0_11 = arith.constant 0 : index
    %c0_12 = arith.constant 0 : index
    %22 = vector.load %arg3[%c0_11, %c0_12] : memref<8x128xf32, #tpu.memory_space<vmem>>, vector<8x128xf32>
    %23 = vector.broadcast %21 : vector<1x128xf32> to vector<8x128xf32>
    %24 = arith.mulf %23, %22 : vector<8x128xf32>
    %25 = arith.subf %16, %24 : vector<8x128xf32>
    %c0_13 = arith.constant 0 : index
    %c0_14 = arith.constant 0 : index
    %26 = vector.load %arg8[%c0_13, %c0_14] : memref<8x128xf32, #tpu.memory_space<vmem>>, vector<8x128xf32>
    tpu.vector_store %arg8[%c0_13, %c0_14], %25 {strides = array<i32>} : memref<8x128xf32, #tpu.memory_space<vmem>>, vector<8x128xf32>,
    %c0_15 = arith.constant 0 : index
    %c0_16 = arith.constant 0 : index
    %27 = vector.load %arg7[%c0_15, %c0_16] : memref<1x128xf32, #tpu.memory_space<vmem>>, vector<1x128xf32>
    %28 = vector.broadcast %27 : vector<1x128xf32> to vector<8x128xf32>
    %29 = arith.mulf %28, %20 : vector<8x128xf32>
    %30 = arith.subf %24, %29 : vector<8x128xf32>
    %c0_17 = arith.constant 0 : index
    %c0_18 = arith.constant 0 : index
    %31 = vector.load %arg9[%c0_17, %c0_18] : memref<8x128xf32, #tpu.memory_space<vmem>>, vector<8x128xf32>
    tpu.vector_store %arg9[%c0_17, %c0_18], %30 {strides = array<i32>} : memref<8x128xf32, #tpu.memory_space<vmem>>, vector<8x128xf32>,
    return
  }
  func.func @transform_0(%arg0: i32, %arg1: i32) -> (i32, i32) {
    %c0_i32 = arith.constant 0 : i32
    %c0_i32_0 = arith.constant 0 : i32
    return %arg0, %c0_i32 : i32, i32
  }
  func.func @transform_1(%arg0: i32, %arg1: i32) -> (i32, i32) {
    %c0_i32 = arith.constant 0 : i32
    return %arg0, %arg1 : i32, i32
  }
  func.func @transform_2(%arg0: i32, %arg1: i32) -> (i32, i32) {
    %c0_i32 = arith.constant 0 : i32
    %c0_i32_0 = arith.constant 0 : i32
    return %c0_i32, %arg1 : i32, i32
  }
  func.func @transform_3(%arg0: i32, %arg1: i32) -> (i32, i32) {
    %c0_i32 = arith.constant 0 : i32
    %c0_i32_0 = arith.constant 0 : i32
    return %c0_i32, %arg1 : i32, i32
  }
  func.func @transform_4(%arg0: i32, %arg1: i32) -> (i32, i32) {
    %c0_i32 = arith.constant 0 : i32
    %c0_i32_0 = arith.constant 0 : i32
    return %c0_i32, %arg1 : i32, i32
  }
  func.func @transform_5(%arg0: i32, %arg1: i32) -> (i32, i32) {
    %c0_i32 = arith.constant 0 : i32
    %c0_i32_0 = arith.constant 0 : i32
    return %c0_i32, %arg1 : i32, i32
  }
  func.func @transform_6(%arg0: i32, %arg1: i32) -> (i32, i32) {
    %c0_i32 = arith.constant 0 : i32
    return %arg0, %arg1 : i32, i32
  }
  func.func @transform_7(%arg0: i32, %arg1: i32) -> (i32, i32) {
    %c0_i32 = arith.constant 0 : i32
    return %arg0, %arg1 : i32, i32
  }
}

</mosaic_0001>

<llo_original>
// kernel: squeeze.2
$region0: #{squeeze.2}
  %s0 = inlined_call_operand.vmem [shape: f32[48], index: 0, kind: input, shape index: {}]
  %s1 = inlined_call_operand.vmem [shape: f32[6,8], index: 1, kind: output, shape index: {}]
  $region1: #{squeeze.2} parent=0
    #allocation0 [shape = 'u8[4096]{0}', space=vmem, size = 0x1000, scoped, tag = 'scoped mem for input reshape']
    %s3 = sshllo.u32 0, 1
    %v4 = vld [vmem:[%s0] sm:%s3]
    %5 = vst [vmem:[#allocation0] sm:%s3] %v4
    %v6 = vld [vmem:[#allocation0] sm:$0x1]
    %vm7 = vcmask 64512
    %8 = vst.msk [vmem:[%s1] sm:$0x1] %vm7, %v6
    %v9 = vld [vmem:[#allocation0] sm:$0x1]
    %10 = vrot.lane.b32.xlu0 %v9, 120
    %v11 = vpop.permute.xlu0 %10
    %vm12 = vcmask 64512
    %s13 = scalar_lea.vmem %s1, 1
    %14 = vst.msk [vmem:[%s13] sm:$0x1] %vm12, %v11
    %v15 = vld [vmem:[#allocation0] sm:$0x1]
    %16 = vrot.lane.b32.xlu0 %v15, 112
    %v17 = vpop.permute.xlu0 %16
    %vm18 = vcmask 64512
    %s19 = scalar_lea.vmem %s1, 2
    %20 = vst.msk [vmem:[%s19] sm:$0x1] %vm18, %v17
    %v21 = vld [vmem:[#allocation0] sm:$0x1]
    %22 = vrot.lane.b32.xlu0 %v21, 104
    %v23 = vpop.permute.xlu0 %22
    %vm24 = vcmask 64512
    %s25 = scalar_lea.vmem %s1, 3
    %26 = vst.msk [vmem:[%s25] sm:$0x1] %vm24, %v23
    %v27 = vld [vmem:[#allocation0] sm:$0x1]
    %28 = vrot.lane.b32.xlu0 %v27, 96
    %v29 = vpop.permute.xlu0 %28
    %vm30 = vcmask 64512
    %s31 = scalar_lea.vmem %s1, 4
    %32 = vst.msk [vmem:[%s31] sm:$0x1] %vm30, %v29
    %v33 = vld [vmem:[#allocation0] sm:$0x1]
    %34 = vrot.lane.b32.xlu0 %v33, 88
    %v35 = vpop.permute.xlu0 %34
    %vm36 = vcmask 64512
    %s37 = scalar_lea.vmem %s1, 5
    %38 = vst.msk [vmem:[%s37] sm:$0x1] %vm36, %v35

// kernel: v_encoder_batch_forward.1
$region0: #{v_encoder_batch_forward.1}
  #allocation0 [shape = 'u32[]', space=smem, size = 0x4, offset = 0x4, fixed_abs, tag = 'smem constant byte address 0x4 - core index']
  #allocation1 [shape = 'u32[144,128]{1,0:T(1,128)}', space=vmem, size = 0x12000, scoped, tag = 'internal scratch']
  %s0 = inlined_call_operand.vmem [shape: f32[8,128], index: 0, kind: input, shape index: {}]
  %s1 = inlined_call_operand.vmem [shape: f32[8,128], index: 1, kind: input, shape index: {}]
  %s2 = inlined_call_operand.vmem [shape: bf16[128,128], index: 2, kind: input, shape index: {}]
  %s3 = inlined_call_operand.vmem [shape: f32[1,128], index: 3, kind: input, shape index: {}]
  %s4 = inlined_call_operand.vmem [shape: f32[1,128], index: 4, kind: input, shape index: {}]
  %s5 = inlined_call_operand.vmem [shape: f32[1,128], index: 5, kind: input, shape index: {}]
  %s6 = inlined_call_operand.vmem [shape: f32[8,128], index: 6, kind: output, shape index: {0}]
  %s7 = inlined_call_operand.vmem [shape: f32[8,128], index: 7, kind: output, shape index: {1}]
  %8 = xla_tuple %s6, %s7
  %s9 = sld [smem:[#allocation0]]
  $region42: #{v_encoder_batch_forward.1} parent=0
    _
  %s11 = ssub.s32 1, %s9
  %s12 = scalar_select 0, %s11, %s9
  // Predicated region
  $region2: #{v_encoder_batch_forward.1} parent=0 // pred_check
    _
  $region3: #{v_encoder_batch_forward.1} parent=0 // pred_check_branch
    %14 = sbr.rel (0) target = $region5
  $region4: #{v_encoder_batch_forward.1} parent=0 // pred_region
    _
  $region5: #{v_encoder_batch_forward.1} parent=0 // pred_fallthru
    _
  // Predicated region
  $region6: #{v_encoder_batch_forward.1} parent=0 // pred_check
    _
  $region7: #{v_encoder_batch_forward.1} parent=0 // pred_check_branch
    %16 = sbr.rel (0) target = $region9
  $region8: #{v_encoder_batch_forward.1} parent=0 // pred_region
    _
  $region9: #{v_encoder_batch_forward.1} parent=0 // pred_fallthru
    _
  // Predicated region
  $region10: #{v_encoder_batch_forward.1} parent=0 // pred_check
    _
  $region11: #{v_encoder_batch_forward.1} parent=0 // pred_check_branch
    %18 = sbr.rel (0) target = $region13
  $region12: #{v_encoder_batch_forward.1} parent=0 // pred_region
    _
  $region13: #{v_encoder_batch_forward.1} parent=0 // pred_fallthru
    _
  // Predicated region
  $region14: #{v_encoder_batch_forward.1} parent=0 // pred_check
    _
  $region15: #{v_encoder_batch_forward.1} parent=0 // pred_check_branch
    %20 = sbr.rel (0) target = $region17
  $region16: #{v_encoder_batch_forward.1} parent=0 // pred_region
    _
  $region17: #{v_encoder_batch_forward.1} parent=0 // pred_fallthru
    _
  // Predicated region
  $region18: #{v_encoder_batch_forward.1} parent=0 // pred_check
    _
  $region19: #{v_encoder_batch_forward.1} parent=0 // pred_check_branch
    %22 = sbr.rel (0) target = $region21
  $region20: #{v_encoder_batch_forward.1} parent=0 // pred_region
    _
  $region21: #{v_encoder_batch_forward.1} parent=0 // pred_fallthru
    _
  // Predicated region
  $region22: #{v_encoder_batch_forward.1} parent=0 // pred_check
    _
  $region23: #{v_encoder_batch_forward.1} parent=0 // pred_check_branch
    %24 = sbr.rel (0) target = $region25
  $region24: #{v_encoder_batch_forward.1} parent=0 // pred_region
    _
  $region25: #{v_encoder_batch_forward.1} parent=0 // pred_fallthru
    _
  %v26 = vld [vmem:[%s0] sm:$0xff]
  %v27 = vpack.c.bf16 %v26, %v26
  %v28 = vld [vmem:[%s2] sm:$0xf]
  %v29 = vld [vmem:[%s2 + $0x4] sm:$0xf]
  %v30 = vld [vmem:[%s2 + $0x8] sm:$0xf]
  %v31 = vld [vmem:[%s2 + $0xc] sm:$0xf]
  %v32 = vld [vmem:[%s2 + $0x10] sm:$0xf]
  %v33 = vld [vmem:[%s2 + $0x14] sm:$0xf]
  %v34 = vld [vmem:[%s2 + $0x18] sm:$0xf]
  %v35 = vld [vmem:[%s2 + $0x1c] sm:$0xf]
  %v36 = vld [vmem:[%s2 + $0x20] sm:$0xf]
  %v37 = vld [vmem:[%s2 + $0x24] sm:$0xf]
  %v38 = vld [vmem:[%s2 + $0x28] sm:$0xf]
  %v39 = vld [vmem:[%s2 + $0x2c] sm:$0xf]
  %v40 = vld [vmem:[%s2 + $0x30] sm:$0xf]
  %v41 = vld [vmem:[%s2 + $0x34] sm:$0xf]
  %v42 = vld [vmem:[%s2 + $0x38] sm:$0xf]
  %v43 = vld [vmem:[%s2 + $0x3c] sm:$0xf]
  %v44 = vld [vmem:[%s3] sm:$0x1]
  %v46 = vlaneseq
  %v47 = vshrl.u32 %v46, 7
  %v48 = vsub.s32 0, %v47
  %v49 = vrot.slane %v44, %v48
  %v67 = vunpack.c.l.b16 %v28
  %v68 = vunpack.c.l.b16 %v29
  %v69 = vunpack.c.l.b16 %v30
  %v70 = vunpack.c.l.b16 %v31
  %v71 = vunpack.c.l.b16 %v32
  %v72 = vunpack.c.l.b16 %v33
  %v73 = vunpack.c.l.b16 %v34
  %v74 = vunpack.c.l.b16 %v35
  %v75 = vunpack.c.l.b16 %v36
  %v76 = vunpack.c.l.b16 %v37
  %v77 = vunpack.c.l.b16 %v38
  %v78 = vunpack.c.l.b16 %v39
  %v79 = vunpack.c.l.b16 %v40
  %v80 = vunpack.c.l.b16 %v41
  %v81 = vunpack.c.l.b16 %v42
  %v82 = vunpack.c.l.b16 %v43
  %v83 = vpack.c.b16 %v68, %v67
  %v84 = vpack.c.b16 %v70, %v69
  %v85 = vpack.c.b16 %v72, %v71
  %v86 = vpack.c.b16 %v74, %v73
  %v87 = vpack.c.b16 %v76, %v75
  %v88 = vpack.c.b16 %v78, %v77
  %v89 = vpack.c.b16 %v80, %v79
  %v90 = vpack.c.b16 %v82, %v81
  %99 = vmatprep.subr.bf16.mxu0 0
  %100 = vmatpush1.bf16.msra.mxu0 %v83
  %101 = vmatprep.subr.bf16.mxu0 0
  %102 = vmatpush1.bf16.msra.mxu0 %v84
  %103 = vmatprep.subr.bf16.mxu0 0
  %104 = vmatpush1.bf16.msra.mxu0 %v85
  %105 = vmatprep.subr.bf16.mxu0 0
  %106 = vmatpush1.bf16.msra.mxu0 %v86
  %107 = vmatprep.subr.bf16.mxu0 0
  %108 = vmatpush1.bf16.msra.mxu0 %v87
  %109 = vmatprep.subr.bf16.mxu0 0
  %110 = vmatpush1.bf16.msra.mxu0 %v88
  %111 = vmatprep.subr.bf16.mxu0 0
  %112 = vmatpush1.bf16.msra.mxu0 %v89
  %113 = vmatprep.subr.bf16.mxu0 0
  %114 = vmatpush1.bf16.msra.mxu0 %v90
  %115 = vmatprep.subr.bf16.mxu0 0
  %116 = vmatpush1.bf16.msra.mxu0 0
  %117 = vmatprep.subr.bf16.mxu0 0
  %118 = vmatpush1.bf16.msra.mxu0 0
  %119 = vmatprep.subr.bf16.mxu0 0
  %120 = vmatpush1.bf16.msra.mxu0 0
  %121 = vmatprep.subr.bf16.mxu0 0
  %122 = vmatpush1.bf16.msra.mxu0 0
  %123 = vmatprep.subr.bf16.mxu0 0
  %124 = vmatpush1.bf16.msra.mxu0 0
  %125 = vmatprep.subr.bf16.mxu0 0
  %126 = vmatpush1.bf16.msra.mxu0 0
  %127 = vmatprep.subr.bf16.mxu0 0
  %128 = vmatpush1.bf16.msra.mxu0 0
  %129 = vmatprep.subr.bf16.mxu0 0
  %130 = vmatpush1.bf16.msra.mxu0 0
  %131 = vmatprep.mubr.bf16.mxu0 0
  %132 = vmatmul.mubr.bf16.gmra.mrb[0].mxu0 %v27
  %v133 = vpop.f32.mrb[0].mxu0
  %v134 = vadd.f32 %v49, %v133
  %v135 = vpop.f32.mrb[0].mxu0
  %v136 = vpop.f32.mrb[0].mxu0
  %v137 = vpop.f32.mrb[0].mxu0
  %138 = vdwg.mxu0
  %v139 = vand.u32 2147483647, %v134
  %v140 = vsub.f32 0.0, %v139
  %v141 = vmul.f32 %v140, 1.442695
  %v142 = vpow.pop %v141
  %v143 = vadd.f32 %v142, 1.0
  %v144 = vlog2.pop %v143
  %v145 = vmul.f32 %v144, 0.6931472
  %v146 = vmul.f32 -0.5, %v142
  %v147 = vadd.f32 %v146, 1.0
  %v148 = vmul.f32 %v147, %v142
  %v149 = vand.u32 2147483647, %v142
  %vm150 = vcmp.lt.f32.partialorder %v149, 0.0004427343
  %v151 = vsel %vm150, %v148, %v145
  %v152 = vmax.f32 %v134, 0.0
  %v153 = vadd.f32 %v151, %v152
  %v154 = vmin.f32 %v153, 50.0
  %s155 = smul.u32 0, 128
  %s156 = sshra.s32 %s155, 7
  %s157 = sand.u32 %s155, 127
  %s158 = scalar_lea.vmem %s0, %s156
  %v159 = vld [vmem:[%s158] sm:$0xff]
  %v160 = vld [vmem:[%s4] sm:$0x1]
  %v161 = vld [vmem:[%s1] sm:$0xff]
  %v163 = vlaneseq
  %v164 = vshrl.u32 %v163, 7
  %v165 = vsub.s32 0, %v164
  %v166 = vrot.slane %v160, %v165
  %v168 = vmul.f32 %v166, %v161
  %v169 = vsub.f32 %v154, %v168
  %170 = vst [vmem:[%s6] sm:$0xff] %v169
  %v171 = vld [vmem:[%s5] sm:$0x1]
  %v173 = vlaneseq
  %v174 = vshrl.u32 %v173, 7
  %v175 = vsub.s32 0, %v174
  %v176 = vrot.slane %v171, %v175
  %v178 = vmul.f32 %v176, %v159
  %v179 = vsub.f32 %v168, %v178
  %180 = vst [vmem:[%s7] sm:$0xff] %v179
  // Predicated region
  $region26: #{v_encoder_batch_forward.1} parent=0 // pred_check
    _
  $region27: #{v_encoder_batch_forward.1} parent=0 // pred_check_branch
    %182 = sbr.rel (0) target = $region29
  $region28: #{v_encoder_batch_forward.1} parent=0 // pred_region
    _
  $region29: #{v_encoder_batch_forward.1} parent=0 // pred_fallthru
    _
  // Predicated region
  $region30: #{v_encoder_batch_forward.1} parent=0 // pred_check
    _
  $region31: #{v_encoder_batch_forward.1} parent=0 // pred_check_branch
    %184 = sbr.rel (0) target = $region33
  $region32: #{v_encoder_batch_forward.1} parent=0 // pred_region
    _
  $region33: #{v_encoder_batch_forward.1} parent=0 // pred_fallthru
    _
  // Predicated region
  $region34: #{v_encoder_batch_forward.1} parent=0 // pred_check
    _
  $region35: #{v_encoder_batch_forward.1} parent=0 // pred_check_branch
    %186 = sbr.rel (0) target = $region37
  $region36: #{v_encoder_batch_forward.1} parent=0 // pred_region
    _
  $region37: #{v_encoder_batch_forward.1} parent=0 // pred_fallthru
    _
  // Predicated region
  $region38: #{v_encoder_batch_forward.1} parent=0 // pred_check
    _
  $region39: #{v_encoder_batch_forward.1} parent=0 // pred_check_branch
    %188 = sbr.rel (0) target = $region41
  $region40: #{v_encoder_batch_forward.1} parent=0 // pred_region
    _
  $region41: #{v_encoder_batch_forward.1} parent=0 // pred_fallthru
    _

</llo_original>
